<compile_context>
chip_gen: v7x
topology: tpu7x:2x2x1
jax: 0.10.0
libtpu: 0.0.40
codegen_flags: <defaults>
</compile_context>

<pallas_src>
import functools

import jax
import jax.numpy as jnp
from jax import lax
from jax.experimental import pallas as pl
from jax.experimental.pallas import tpu as pltpu


# --------------------------------------------------------------------------- #
# Shared conv + sigmoid on lane-flattened pooled maps
# --------------------------------------------------------------------------- #
def _conv_sigmoid(w_ref, mean_map, max_map, *, width, true_hw):
    """2x2 'same' conv (asymmetric pad) + sigmoid on (rows, HWp) f32 maps.

    w_ref: (8,) f32 SMEM, flattened OIHW weight in [in_c, kh, kw] order.
    """
    HWp = mean_map.shape[-1]
    W = width
    pos = lax.broadcasted_iota(jnp.int32, (1, HWp), 1)
    valid_w = (pos % W) != (W - 1)          # kill w == W-1 column for the w+1 taps
    valid_h = pos < (true_hw - W)           # kill the last row for the h+1 taps
    sh_r = (HWp - 1) % HWp                  # y[p] = P[p+1]
    sh_d = (HWp - W) % HWp                  # y[p] = P[p+W]
    sh_dr = (HWp - W - 1) % HWp             # y[p] = P[p+W+1]

    # Per-tap premix of [mean; max]; taps accumulated one at a time so only one
    # shifted f32 temporary is live at once (short live ranges, low vreg pressure).
    conv = w_ref[0] * mean_map + w_ref[4] * max_map
    t = w_ref[1] * mean_map + w_ref[5] * max_map
    conv = conv + jnp.where(valid_w, pltpu.roll(t, sh_r, axis=1), 0.0)
    t = w_ref[2] * mean_map + w_ref[6] * max_map
    conv = conv + jnp.where(valid_h, pltpu.roll(t, sh_d, axis=1), 0.0)
    t = w_ref[3] * mean_map + w_ref[7] * max_map
    conv = conv + jnp.where(valid_h & valid_w, pltpu.roll(t, sh_dr, axis=1), 0.0)
    return jax.nn.sigmoid(conv)


# --------------------------------------------------------------------------- #
# Fused single-pass kernel (whole (bt, C, HWp) block fits VMEM)
# --------------------------------------------------------------------------- #
def _sa_cbam_kernel(w_ref, x_ref, o_ref, *, width, true_hw):
    x = x_ref[...]                                         # (bt, C, HWp), native dtype
    mean_map = jnp.mean(x, axis=1, dtype=jnp.float32)      # f32 accumulation
    max_map = jnp.max(x, axis=1).astype(jnp.float32)
    attn = _conv_sigmoid(w_ref, mean_map, max_map, width=width, true_hw=true_hw)
    o_ref[...] = attn.astype(x.dtype)[:, None, :] * x      # broadcast over C


# --------------------------------------------------------------------------- #
# Two-pass path (single batch item too large for VMEM): pass 1 = pooling+conv
# --------------------------------------------------------------------------- #
def _pool_conv_kernel(w_ref, x_ref, attn_ref, sum_ref, max_ref, *,
                      width, true_hw, total_c, c_tile):
    c = pl.program_id(1)

    @pl.when(c == 0)
    def _():
        sum_ref[...] = jnp.zeros(sum_ref.shape, sum_ref.dtype)
        max_ref[...] = jnp.full(max_ref.shape, -jnp.inf, max_ref.dtype)

    x = x_ref[...].astype(jnp.float32)                     # (1, c_tile, HWp)
    # Mask channel rows past the true C (last, possibly padded, C tile).
    ch = c * c_tile + lax.broadcasted_iota(jnp.int32, (1, c_tile, 1), 1)
    valid_c = ch < total_c
    sum_ref[...] += jnp.sum(jnp.where(valid_c, x, 0.0), axis=1)
    max_ref[...] = jnp.maximum(max_ref[...],
                               jnp.max(jnp.where(valid_c, x, -jnp.inf), axis=1))

    @pl.when(c == pl.num_programs(1) - 1)
    def _():
        mean_map = sum_ref[...] * (1.0 / total_c)
        attn = _conv_sigmoid(w_ref, mean_map, max_ref[...],
                             width=width, true_hw=true_hw)
        attn_ref[...] = attn[:, None, :]                   # (1, 1, HWp) f32


# Two-pass path: pass 2 = elementwise attn * x, C-tiled
def _apply_attn_kernel(attn_ref, x_ref, o_ref):
    x = x_ref[...]                                         # (1, ct, HWp)
    o_ref[...] = attn_ref[...].astype(x.dtype) * x         # (1,1,HWp) bcast over C


# --------------------------------------------------------------------------- #
# Wrappers
# --------------------------------------------------------------------------- #
def _tensorcores_per_chip():
    # v7x has 2 TensorCores per chip (work sharded via "parallel" grid axes);
    # v5e/v6e have 1, where block-halving only shrinks DMAs for no gain.
    try:
        kind = jax.devices()[0].device_kind.lower()
    except Exception:
        return 1
    return 2 if "v7" in kind else 1


def _single_pass_path(xf, w_flat, *, B, C, W, HW, HWp, itemsize, budget,
                      item_live, batch_tile):
    num_tc = _tensorcores_per_chip()
    bt_cap = max(1, budget // item_live)
    if batch_tile is not None:
        bt = max(1, min(int(batch_tile), B))
    elif num_tc >= 2:
        # Aim for >= ~4 pipelined grid steps per TensorCore when B allows.
        bt = max(1, min(bt_cap, B // (4 * num_tc)))
    else:
        bt = min(bt_cap, B)        # single TC: largest block under the budget

    nb = -(-B // bt)               # cdiv grid; pad the batch, no divisor hunt
    Bp = nb * bt
    if Bp != B:
        xf = jnp.pad(xf, ((0, Bp - B), (0, 0), (0, 0)))

    out = pl.pallas_call(
        functools.partial(_sa_cbam_kernel, width=W, true_hw=HW),
        out_shape=jax.ShapeDtypeStruct((Bp, C, HWp), xf.dtype),
        grid=(nb,),
        in_specs=[
            pl.BlockSpec(memory_space=pltpu.MemorySpace.SMEM),        # conv weights
            pl.BlockSpec((bt, C, HWp), lambda b: (b, 0, 0)),          # x
        ],
        out_specs=pl.BlockSpec((bt, C, HWp), lambda b: (b, 0, 0)),
        compiler_params=pltpu.CompilerParams(dimension_semantics=("parallel",)),
        cost_estimate=pl.CostEstimate(
            flops=int(Bp * HWp * (3 * C + 12)),
            transcendentals=int(Bp * HWp),
            bytes_accessed=int(2 * Bp * C * HWp * itemsize)),
    )(w_flat, xf)
    return out[:B]


def _two_pass_path(xf, w_flat, *, B, C, W, HW, HWp, itemsize, budget, channel_tile):
    # Channel tile: pass 2 holds double-buffered input AND output (1, ct, HWp)
    # blocks; pass 1 only the input block plus ~12 f32 row temporaries. Size for
    # the stricter pass-2 footprint and reuse the tile in both passes.
    sub = max(8, 32 // itemsize)               # sublane granularity per dtype
    fixed = 12 * HWp * 4
    ct_cap = max(sub, ((max(budget - fixed, 0)) // (4 * HWp * itemsize)) // sub * sub)
    if channel_tile is None:
        ct = min(C, ct_cap)
    else:
        ct = max(1, min(int(channel_tile), C))
    if ct < C:
        ct = max(sub, (ct // sub) * sub)
    if ct >= C:
        ct = C
    n_ct = -(-C // ct)
    Cp = n_ct * ct
    if Cp != C:
        xf = jnp.pad(xf, ((0, 0), (0, Cp - C), (0, 0)))    # pads masked in-kernel

    # Pass 1: channel pooling accumulated across C tiles; conv+sigmoid at the end.
    attn = pl.pallas_call(
        functools.partial(_pool_conv_kernel, width=W, true_hw=HW,
                          total_c=C, c_tile=ct),
        out_shape=jax.ShapeDtypeStruct((B, 1, HWp), jnp.float32),
        grid=(B, n_ct),
        in_specs=[
            pl.BlockSpec(memory_space=pltpu.MemorySpace.SMEM),
            pl.BlockSpec((1, ct, HWp), lambda b, c: (b, c, 0)),
        ],
        out_specs=pl.BlockSpec((1, 1, HWp), lambda b, c: (b, 0, 0)),
        scratch_shapes=[pltpu.VMEM((1, HWp), jnp.float32),
                        pltpu.VMEM((1, HWp), jnp.float32)],
        compiler_params=pltpu.CompilerParams(
            dimension_semantics=("parallel", "arbitrary")),
        cost_estimate=pl.CostEstimate(
            flops=int(B * Cp * HWp * 3 + B * HWp * 12),
            transcendentals=int(B * HWp),
            bytes_accessed=int(B * Cp * HWp * itemsize + B * HWp * 4)),
    )(w_flat, xf)

    # Pass 2: elementwise attn * x over (B, C_tiles), both axes parallel.
    out = pl.pallas_call(
        _apply_attn_kernel,
        out_shape=jax.ShapeDtypeStruct((B, Cp, HWp), xf.dtype),
        grid=(B, n_ct),
        in_specs=[
            pl.BlockSpec((1, 1, HWp), lambda b, c: (b, 0, 0)),
            pl.BlockSpec((1, ct, HWp), lambda b, c: (b, c, 0)),
        ],
        out_specs=pl.BlockSpec((1, ct, HWp), lambda b, c: (b, c, 0)),
        compiler_params=pltpu.CompilerParams(
            dimension_semantics=("parallel", "parallel")),
        cost_estimate=pl.CostEstimate(
            flops=int(B * Cp * HWp),
            transcendentals=0,
            bytes_accessed=int(2 * B * Cp * HWp * itemsize + B * HWp * 4)),
    )(attn, xf)
    return out[:, :C]


def spatial_attention_cbam(x, conv_weight, *,
                           vmem_budget_bytes=10 * 1024 * 1024,
                           batch_tile=None, channel_tile=None,
                           force_two_pass=False):
    """x: (B, C, H, W); conv_weight: (1, 2, 2, 2) OIHW, bias-free 2->1 conv."""
    B, C, H, W = map(int, x.shape)
    HW = H * W
    HWp = -(-HW // 128) * 128                 # lane-dense: pad H*W to multiple of 128
    itemsize = jnp.dtype(x.dtype).itemsize
    w_flat = conv_weight.reshape(-1).astype(jnp.float32)   # [in_c, kh, kw] order

    xf = jnp.reshape(x, (B, C, HW))
    if HWp != HW:
        xf = jnp.pad(xf, ((0, 0), (0, 0), (0, HWp - HW)))

    # Live-VMEM estimate for ONE batch item of the fused kernel: double-buffered
    # input + output x blocks plus ~6 f32 (HWp,) row temporaries (with margin).
    # TODO(synk): for very small C, pack channels into lanes ((B,C,HW)->(B,C/g,g*HW))
    # on the multiply/store path to restore full 8x128 vreg occupancy.
    x_item_bytes = C * HWp * itemsize
    single_item_live = 4 * x_item_bytes + 8 * HWp * 4

    if force_two_pass or single_item_live > vmem_budget_bytes:
        out = _two_pass_path(xf, w_flat, B=B, C=C, W=W, HW=HW, HWp=HWp,
                             itemsize=itemsize, budget=vmem_budget_bytes,
                             channel_tile=channel_tile)
    else:
        out = _single_pass_path(xf, w_flat, B=B, C=C, W=W, HW=HW, HWp=HWp,
                                itemsize=itemsize, budget=vmem_budget_bytes,
                                item_live=single_item_live, batch_tile=batch_tile)

    return out[:, :, :HW].reshape(B, C, H, W)


# TODO(synk): arbitrary kernel_size / attention_out callables from the module's
# __init__ are not translated; the module defaults ((2,2) conv + sigmoid) are.


def _reference(x, conv_weight):
    """Pure-JAX reference matching PyTorch's forward exactly."""
    pooled = jnp.concatenate(
        [jnp.mean(x, axis=1, keepdims=True), jnp.max(x, axis=1, keepdims=True)],
        axis=1)                                                  # (B,2,H,W)
    conv = lax.conv_general_dilated(
        pooled, conv_weight, window_strides=(1, 1),
        padding=((0, 1), (0, 1)),                                # even-k 'same'
        dimension_numbers=("NCHW", "OIHW", "NCHW"))
    return jax.nn.sigmoid(conv) * x


if __name__ == "__main__":
    key = jax.random.PRNGKey(0)
    kx, kw, kx2, kx3 = jax.random.split(key, 4)

    # Deterministic Conv2d(2, 1, kernel_size=(2, 2), bias=False) weight, OIHW.
    conv_weight = jax.random.uniform(kw, (1, 2, 2, 2), dtype=jnp.float32) - 0.5

    # Primary check: fused single-pass path.
    B, C, H, W = 2, 4, 16, 16
    x = jax.random.normal(kx, (B, C, H, W), dtype=jnp.float32)
    out = jax.block_until_ready(spatial_attention_cbam(x, conv_weight))
    assert out.shape == (B, C, H, W)
    assert jnp.allclose(out, _reference(x, conv_weight), atol=1e-5, rtol=1e-5)

    # Ragged batch with a forced batch tile (exercises cdiv grid + batch padding).
    x3 = jax.random.normal(kx3, (3, 4, 16, 16), dtype=jnp.float32)
    out3 = jax.block_until_ready(
        spatial_attention_cbam(x3, conv_weight, batch_tile=2))
    assert jnp.allclose(out3, _reference(x3, conv_weight), atol=1e-5, rtol=1e-5)

    # C-tiled two-pass path (ragged C vs channel tile, non-128-multiple H*W).
    x2 = jax.random.normal(kx2, (2, 12, 8, 9), dtype=jnp.float32)
    out2 = jax.block_until_ready(
        spatial_attention_cbam(x2, conv_weight, force_two_pass=True, channel_tile=8))
    assert jnp.allclose(out2, _reference(x2, conv_weight), atol=1e-5, rtol=1e-5)

    print("KERNEL_OK")
</pallas_src>

<mosaic_0001>
module attributes {stable_mosaic.version = 11 : i64} {
  func.func @_sa_cbam_kernel(%arg0: i32, %arg1: memref<8xf32, #tpu.memory_space<smem>>, %arg2: memref<2x4x256xf32, #tpu.memory_space<vmem>>, %arg3: memref<2x4x256xf32, #tpu.memory_space<vmem>>) attributes {dimension_semantics = [#tpu.dimension_semantics<parallel>], iteration_bounds = array<i64: 1>, scalar_prefetch = 0 : i64, scratch_operands = 0 : i64, tpu.core_type = #tpu.core_type<tc>, window_params = [{transform_indices = @transform_0, window_bounds = array<i64: 8>}, {transform_indices = @transform_1, window_bounds = array<i64: 2, 4, 256>}, {transform_indices = @transform_2, window_bounds = array<i64: 2, 4, 256>}]} {
    %c0 = arith.constant 0 : index
    %c0_0 = arith.constant 0 : index
    %c0_1 = arith.constant 0 : index
    %0 = vector.load %arg2[%c0, %c0_0, %c0_1] : memref<2x4x256xf32, #tpu.memory_space<vmem>>, vector<2x4x256xf32>
    %cst = arith.constant dense<0.000000e+00> : vector<2x256xf32>
    %1 = vector.multi_reduction <add>, %0, %cst [1] : vector<2x4x256xf32> to vector<2x256xf32>
    %cst_2 = arith.constant 4.000000e+00 : f32
    %2 = vector.broadcast %cst_2 : f32 to vector<2x256xf32>
    %3 = arith.divf %1, %2 : vector<2x256xf32>
    %cst_3 = arith.constant dense<0xFF800000> : vector<2x256xf32>
    %4 = vector.multi_reduction <maximumf>, %0, %cst_3 [1] : vector<2x4x256xf32> to vector<2x256xf32>
    %5 = tpu.iota {dimensions = array<i32: 1>} : vector<1x256xi32>
    %c16_i32 = arith.constant 16 : i32
    %c0_i32 = arith.constant 0 : i32
    %6 = arith.cmpi eq, %c16_i32, %c0_i32 : i32
    %c1_i32 = arith.constant 1 : i32
    %7 = arith.select %6, %c1_i32, %c16_i32 : i32
    %8 = vector.broadcast %7 : i32 to vector<1x256xi32>
    %9 = arith.remsi %5, %8 : vector<1x256xi32>
    %c0_i32_4 = arith.constant 0 : i32
    %10 = vector.broadcast %c0_i32_4 : i32 to vector<1x256xi32>
    %11 = arith.cmpi ne, %9, %10 : vector<1x256xi32>
    %c0_i32_5 = arith.constant 0 : i32
    %12 = vector.broadcast %c0_i32_5 : i32 to vector<1x256xi32>
    %13 = arith.cmpi slt, %9, %12 : vector<1x256xi32>
    %c0_i32_6 = arith.constant 0 : i32
    %14 = arith.cmpi slt, %7, %c0_i32_6 : i32
    %15 = vector.broadcast %14 : i1 to vector<1x256xi1>
    %16 = vector.broadcast %15 : vector<1x256xi1> to vector<1x256xi1>
    %17 = arith.xori %13, %16 : vector<1x256xi1>
    %18 = arith.andi %17, %11 : vector<1x256xi1>
    %19 = vector.broadcast %7 : i32 to vector<1x256xi32>
    %20 = arith.addi %9, %19 : vector<1x256xi32>
    %21 = arith.select %18, %20, %9 : vector<1x256xi1>, vector<1x256xi32>
    %c15_i32 = arith.constant 15 : i32
    %22 = vector.broadcast %c15_i32 : i32 to vector<1x256xi32>
    %23 = arith.cmpi ne, %21, %22 : vector<1x256xi32>
    %c240_i32 = arith.constant 240 : i32
    %24 = vector.broadcast %c240_i32 : i32 to vector<1x256xi32>
    %25 = arith.cmpi slt, %5, %24 : vector<1x256xi32>
    %c0_7 = arith.constant 0 : index
    %26 = memref.load %arg1[%c0_7] : memref<8xf32, #tpu.memory_space<smem>>
    %27 = vector.broadcast %26 : f32 to vector<2x256xf32>
    %28 = arith.mulf %27, %3 : vector<2x256xf32>
    %c4 = arith.constant 4 : index
    %29 = memref.load %arg1[%c4] : memref<8xf32, #tpu.memory_space<smem>>
    %30 = vector.broadcast %29 : f32 to vector<2x256xf32>
    %31 = arith.mulf %30, %4 : vector<2x256xf32>
    %32 = arith.addf %28, %31 : vector<2x256xf32>
    %c1 = arith.constant 1 : index
    %33 = memref.load %arg1[%c1] : memref<8xf32, #tpu.memory_space<smem>>
    %34 = vector.broadcast %33 : f32 to vector<2x256xf32>
    %35 = arith.mulf %34, %3 : vector<2x256xf32>
    %c5 = arith.constant 5 : index
    %36 = memref.load %arg1[%c5] : memref<8xf32, #tpu.memory_space<smem>>
    %37 = vector.broadcast %36 : f32 to vector<2x256xf32>
    %38 = arith.mulf %37, %4 : vector<2x256xf32>
    %39 = arith.addf %35, %38 : vector<2x256xf32>
    %c255_i32 = arith.constant 255 : i32
    %40 = tpu.dynamic_rotate %39 by %c255_i32 dim 1 : vector<2x256xf32>, i32 -> vector<2x256xf32>
    %cst_8 = arith.constant 0.000000e+00 : f32
    %41 = vector.shape_cast %23 : vector<1x256xi1> to vector<1x256xi1>
    %42 = vector.broadcast %41 : vector<1x256xi1> to vector<2x256xi1>
    %43 = vector.broadcast %cst_8 : f32 to vector<2x256xf32>
    %44 = arith.select %42, %40, %43 : vector<2x256xi1>, vector<2x256xf32>
    %45 = arith.addf %32, %44 : vector<2x256xf32>
    %c2 = arith.constant 2 : index
    %46 = memref.load %arg1[%c2] : memref<8xf32, #tpu.memory_space<smem>>
    %47 = vector.broadcast %46 : f32 to vector<2x256xf32>
    %48 = arith.mulf %47, %3 : vector<2x256xf32>
    %c6 = arith.constant 6 : index
    %49 = memref.load %arg1[%c6] : memref<8xf32, #tpu.memory_space<smem>>
    %50 = vector.broadcast %49 : f32 to vector<2x256xf32>
    %51 = arith.mulf %50, %4 : vector<2x256xf32>
    %52 = arith.addf %48, %51 : vector<2x256xf32>
    %c240_i32_9 = arith.constant 240 : i32
    %53 = tpu.dynamic_rotate %52 by %c240_i32_9 dim 1 : vector<2x256xf32>, i32 -> vector<2x256xf32>
    %cst_10 = arith.constant 0.000000e+00 : f32
    %54 = vector.shape_cast %25 : vector<1x256xi1> to vector<1x256xi1>
    %55 = vector.broadcast %54 : vector<1x256xi1> to vector<2x256xi1>
    %56 = vector.broadcast %cst_10 : f32 to vector<2x256xf32>
    %57 = arith.select %55, %53, %56 : vector<2x256xi1>, vector<2x256xf32>
    %58 = arith.addf %45, %57 : vector<2x256xf32>
    %c3 = arith.constant 3 : index
    %59 = memref.load %arg1[%c3] : memref<8xf32, #tpu.memory_space<smem>>
    %60 = vector.broadcast %59 : f32 to vector<2x256xf32>
    %61 = arith.mulf %60, %3 : vector<2x256xf32>
    %c7 = arith.constant 7 : index
    %62 = memref.load %arg1[%c7] : memref<8xf32, #tpu.memory_space<smem>>
    %63 = vector.broadcast %62 : f32 to vector<2x256xf32>
    %64 = arith.mulf %63, %4 : vector<2x256xf32>
    %65 = arith.addf %61, %64 : vector<2x256xf32>
    %66 = arith.andi %25, %23 : vector<1x256xi1>
    %c239_i32 = arith.constant 239 : i32
    %67 = tpu.dynamic_rotate %65 by %c239_i32 dim 1 : vector<2x256xf32>, i32 -> vector<2x256xf32>
    %cst_11 = arith.constant 0.000000e+00 : f32
    %68 = vector.shape_cast %66 : vector<1x256xi1> to vector<1x256xi1>
    %69 = vector.broadcast %68 : vector<1x256xi1> to vector<2x256xi1>
    %70 = vector.broadcast %cst_11 : f32 to vector<2x256xf32>
    %71 = arith.select %69, %67, %70 : vector<2x256xi1>, vector<2x256xf32>
    %72 = arith.addf %58, %71 : vector<2x256xf32>
    %73 = arith.negf %72 : vector<2x256xf32>
    %74 = math.exp %73 : vector<2x256xf32>
    %cst_12 = arith.constant 1.000000e+00 : f32
    %75 = vector.broadcast %cst_12 : f32 to vector<2x256xf32>
    %76 = arith.addf %75, %74 : vector<2x256xf32>
    %77 = arith.divf %75, %76 : vector<2x256xf32>
    %78 = vector.shape_cast %77 : vector<2x256xf32> to vector<2x1x256xf32>
    %79 = vector.broadcast %78 : vector<2x1x256xf32> to vector<2x4x256xf32>
    %80 = arith.mulf %79, %0 : vector<2x4x256xf32>
    %c0_13 = arith.constant 0 : index
    %c0_14 = arith.constant 0 : index
    %c0_15 = arith.constant 0 : index
    %81 = vector.load %arg3[%c0_13, %c0_14, %c0_15] : memref<2x4x256xf32, #tpu.memory_space<vmem>>, vector<2x4x256xf32>
    tpu.vector_store %arg3[%c0_13, %c0_14, %c0_15], %80 {strides = array<i32>} : memref<2x4x256xf32, #tpu.memory_space<vmem>>, vector<2x4x256xf32>,
    return
  }
  func.func @transform_0(%arg0: i32) -> i32 {
    %c0_i32 = arith.constant 0 : i32
    %c0_i32_0 = arith.constant 0 : i32
    return %c0_i32 : i32
  }
  func.func @transform_1(%arg0: i32) -> (i32, i32, i32) {
    %c0_i32 = arith.constant 0 : i32
    %c0_i32_0 = arith.constant 0 : i32
    %c0_i32_1 = arith.constant 0 : i32
    return %arg0, %c0_i32, %c0_i32_0 : i32, i32, i32
  }
  func.func @transform_2(%arg0: i32) -> (i32, i32, i32) {
    %c0_i32 = arith.constant 0 : i32
    %c0_i32_0 = arith.constant 0 : i32
    %c0_i32_1 = arith.constant 0 : i32
    return %arg0, %c0_i32, %c0_i32_0 : i32, i32, i32
  }
}

</mosaic_0001>

<llo_original>
// kernel: tpu_custom_call.1
$region0: #{tpu_custom_call.1}
  #allocation0 [shape = 'u32[]', space=smem, size = 0x4, offset = 0x4, fixed_abs, tag = 'smem constant byte address 0x4 - core index']
  #allocation1 [shape = 'u32[144,128]{1,0:T(1,128)}', space=vmem, size = 0x12000, scoped, tag = 'internal scratch']
  %s0 = inlined_call_operand.hbm [shape: f32[8], index: 0, kind: input, shape index: {}]
  %s1 = inlined_call_operand.hbm [shape: f32[2,4,256], index: 1, kind: input, shape index: {}]
  %s2 = inlined_call_operand.hbm [shape: f32[2,4,256], index: 2, kind: output, shape index: {}]
  %s3 = sld [smem:[#allocation0]]
  $region26: #{tpu_custom_call.1} parent=0
    _
  %s5 = ssub.s32 1, %s3
  %s6 = scalar_select 0, %s5, %s3
  $region1: #{tpu_custom_call.1} parent=0
    #allocation2 [shape = 'u8[512]{0}', space=smem, size = 0x200, scoped, tag = 'input window, operand 0, single buffered']
    #allocation3 [shape = 's32[1]{0}', space=sflag, size = 0x4, scoped, tag = 'scoped memory for tpu_custom_call.1']
    #allocation4 [shape = 's32[1]{0}', space=sflag, size = 0x4, scoped, tag = 'scoped memory for tpu_custom_call.1']
    #allocation5 [shape = 's32[1]{0}', space=sflag, size = 0x4, scoped, tag = 'scoped memory for tpu_custom_call.1']
    #allocation6 [shape = 'u8[8192]{0}', space=vmem, size = 0x2000, scoped, tag = 'input window, operand 1, single buffered']
    #allocation7 [shape = 'u8[8192]{0}', space=vmem, size = 0x2000, scoped, tag = 'output window, operand 0, single buffered']
    %7 = vsyncpa [#allocation5], 0
    %8 = vsyncpa [#allocation3], 0
    %9 = vsyncpa [#allocation4], 0
    // Predicated region
    $region2: #{tpu_custom_call.1} parent=1 // pred_check
      _
    $region3: #{tpu_custom_call.1} parent=1 // pred_check_branch
      %11 = sbr.rel (0) target = $region5
    $region4: #{tpu_custom_call.1} parent=1 // pred_region
      %s13 = ssub.s32 16, 16
      %14 = vsyncadd [#allocation5], %s13
      %17 = dma.hbm_to_smem %s0, 16, [#allocation2], [#allocation5]
    $region5: #{tpu_custom_call.1} parent=1 // pred_fallthru
      _
    // Predicated region
    $region6: #{tpu_custom_call.1} parent=1 // pred_check
      _
    $region7: #{tpu_custom_call.1} parent=1 // pred_check_branch
      %19 = sbr.rel (0) target = $region9
    $region8: #{tpu_custom_call.1} parent=1 // pred_region
      %s21 = ssub.s32 256, 256
      %22 = vsyncadd [#allocation3], %s21
      %s23 = sshll.u32 [#allocation6], 4
      %s24 = int_to_ptr.vmem [resolvable:$true] %s23
      %29 = dma.hbm_to_vmem [thread:$0]  %s1, 256, %s24, [#allocation3], 128, 128, 8
    $region9: #{tpu_custom_call.1} parent=1 // pred_fallthru
      _
    // Predicated region
    $region10: #{tpu_custom_call.1} parent=1 // pred_check
      _
    $region11: #{tpu_custom_call.1} parent=1 // pred_check_branch
      %31 = sbr.rel (0) target = $region13
    $region12: #{tpu_custom_call.1} parent=1 // pred_region
      %32 = dma.done [#allocation5], 16
    $region13: #{tpu_custom_call.1} parent=1 // pred_fallthru
      _
    // Predicated region
    $region14: #{tpu_custom_call.1} parent=1 // pred_check
      _
    $region15: #{tpu_custom_call.1} parent=1 // pred_check_branch
      %34 = sbr.rel (0) target = $region17
    $region16: #{tpu_custom_call.1} parent=1 // pred_region
      %35 = dma.done [#allocation3], 256
    $region17: #{tpu_custom_call.1} parent=1 // pred_fallthru
      _
    %36 = sfence
    %v37 = vld [vmem:[#allocation6] sm:$0xff]
    %v38 = vld [vmem:[#allocation6 + $0x8] sm:$0xff]
    %v41 = vcombine.high %v37, %v37
    %v42 = vcombine.high %v38, %v38
    %vm45 = vcmask 1043456
    %v46 = vsel %vm45, %v37, 0.0
    %v47 = vrot.slane %v46, 4
    %v48 = vadd.f32 %v46, %v47
    %v49 = vrot.slane %v48, 2
    %v50 = vadd.f32 %v48, %v49
    %v51 = vrot.slane %v50, 1
    %v52 = vadd.f32 %v50, %v51
    %v53 = vsel %vm45, %v41, 0.0
    %v54 = vrot.slane %v53, 4
    %v55 = vadd.f32 %v53, %v54
    %v56 = vrot.slane %v55, 2
    %v57 = vadd.f32 %v55, %v56
    %v58 = vrot.slane %v57, 1
    %v59 = vadd.f32 %v57, %v58
    %v60 = vsel %vm45, %v38, 0.0
    %v61 = vrot.slane %v60, 4
    %v62 = vadd.f32 %v60, %v61
    %v63 = vrot.slane %v62, 2
    %v64 = vadd.f32 %v62, %v63
    %v65 = vrot.slane %v64, 1
    %v66 = vadd.f32 %v64, %v65
    %v67 = vsel %vm45, %v42, 0.0
    %v68 = vrot.slane %v67, 4
    %v69 = vadd.f32 %v67, %v68
    %v70 = vrot.slane %v69, 2
    %v71 = vadd.f32 %v69, %v70
    %v72 = vrot.slane %v71, 1
    %v73 = vadd.f32 %v71, %v72
    %v74 = vrcp.pop 4.0
    %v75 = vmul.f32 %v52, %v74
    %v76 = vmul.f32 %v59, %v74
    %v77 = vmul.f32 %v66, %v74
    %v78 = vmul.f32 %v73, %v74
    %v79 = vsel %vm45, %v37, -inf
    %v80 = vrot.slane %v79, 4
    %v81 = vmax.f32 %v79, %v80
    %v82 = vrot.slane %v81, 2
    %v83 = vmax.f32 %v81, %v82
    %v84 = vrot.slane %v83, 1
    %v85 = vmax.f32 %v83, %v84
    %v86 = vsel %vm45, %v41, -inf
    %v87 = vrot.slane %v86, 4
    %v88 = vmax.f32 %v86, %v87
    %v89 = vrot.slane %v88, 2
    %v90 = vmax.f32 %v88, %v89
    %v91 = vrot.slane %v90, 1
    %v92 = vmax.f32 %v90, %v91
    %v93 = vsel %vm45, %v38, -inf
    %v94 = vrot.slane %v93, 4
    %v95 = vmax.f32 %v93, %v94
    %v96 = vrot.slane %v95, 2
    %v97 = vmax.f32 %v95, %v96
    %v98 = vrot.slane %v97, 1
    %v99 = vmax.f32 %v97, %v98
    %v100 = vsel %vm45, %v42, -inf
    %v101 = vrot.slane %v100, 4
    %v102 = vmax.f32 %v100, %v101
    %v103 = vrot.slane %v102, 2
    %v104 = vmax.f32 %v102, %v103
    %v105 = vrot.slane %v104, 1
    %v106 = vmax.f32 %v104, %v105
    %v107 = vlaneseq
    %v108 = vand.u32 %v107, 127
    %v109 = vadd.s32 %v108, 128
    %vm110 = vcmp.lt.s32.totalorder %v108, 0
    %v111 = vsub.s32 0, %v108
    %v112 = vsel %vm110, %v111, %v108
    %v113 = vshrl.u32 %v112, 4
    %v114 = vand.u32 %v112, 15
    %v115 = vsub.s32 0, %v114
    %v116 = vsel %vm110, %v115, %v114
    %vm117 = vcmp.lt.s32.totalorder %v109, 0
    %v118 = vsub.s32 0, %v109
    %v119 = vsel %vm117, %v118, %v109
    %v120 = vshrl.u32 %v119, 4
    %v121 = vand.u32 %v119, 15
    %v122 = vsub.s32 0, %v121
    %v123 = vsel %vm117, %v122, %v121
    %vm124 = vcmp.ne.s32.totalorder %v116, 0
    %vm125 = vcmp.ne.s32.totalorder %v123, 0
    %vm126 = vcmp.lt.s32.totalorder %v116, 0
    %vm127 = vcmp.lt.s32.totalorder %v123, 0
    %vm128 = vmand %vm126, %vm124
    %vm129 = vmand %vm127, %vm125
    %v130 = vadd.s32 %v116, 16
    %v131 = vadd.s32 %v123, 16
    %v132 = vsel %vm128, %v130, %v116
    %v133 = vsel %vm129, %v131, %v123
    %vm134 = vcmp.ne.s32.totalorder %v132, 15
    %vm135 = vcmp.ne.s32.totalorder %v133, 15
    %vm136 = vcmp.lt.s32.totalorder %v108, 240
    %vm137 = vcmp.lt.s32.totalorder %v109, 240
    %s138 = sld [smem:[#allocation2]]
    %v139 = vstv %s138
    %v140 = vmul.f32 %v139, %v75
    %v141 = vmul.f32 %v139, %v76
    %v142 = vmul.f32 %v139, %v77
    %v143 = vmul.f32 %v139, %v78
    %s144 = sld [smem:[#allocation2 + $0x4]]
    %v145 = vstv %s144
    %v146 = vmul.f32 %v145, %v85
    %v147 = vmul.f32 %v145, %v92
    %v148 = vmul.f32 %v145, %v99
    %v149 = vmul.f32 %v145, %v106
    %v150 = vadd.f32 %v140, %v146
    %v151 = vadd.f32 %v141, %v147
    %v152 = vadd.f32 %v142, %v148
    %v153 = vadd.f32 %v143, %v149
    %s154 = sld [smem:[#allocation2 + $0x1]]
    %v155 = vstv %s154
    %v156 = vmul.f32 %v155, %v75
    %v157 = vmul.f32 %v155, %v76
    %v158 = vmul.f32 %v155, %v77
    %v159 = vmul.f32 %v155, %v78
    %s160 = sld [smem:[#allocation2 + $0x5]]
    %v161 = vstv %s160
    %v162 = vmul.f32 %v161, %v85
    %v163 = vmul.f32 %v161, %v92
    %v164 = vmul.f32 %v161, %v99
    %v165 = vmul.f32 %v161, %v106
    %v166 = vadd.f32 %v156, %v162
    %v167 = vadd.f32 %v157, %v163
    %v168 = vadd.f32 %v158, %v164
    %v169 = vadd.f32 %v159, %v165
    %vm174 = vcmask 1041409
    %v175 = vsel %vm174, %v168, %v166
    %v176 = vsel %vm174, %v169, %v167
    %179 = vrot.lane.b32.xlu0 %v175, 127
    %v180 = vpop.permute.xlu0 %179
    %181 = vrot.lane.b32.xlu0 %v176, 127
    %v182 = vpop.permute.xlu0 %181
    %vm183 = vcmp.lt.s32.totalorder %v108, 127
    %v184 = vsel %vm183, %v180, %v182
    %v185 = vsel %vm183, %v182, %v180
    %v186 = vsel %vm134, 1, 0
    %v187 = vsel %vm135, 1, 0
    %vm188 = vcmp.eq.s32.totalorder %v186, 1
    %vm189 = vcmp.eq.s32.totalorder %v187, 1
    %v190 = vsel %vm188, %v184, 0.0
    %v191 = vsel %vm189, %v185, 0.0
    %v194 = vrot.slane %v190, 1
    %v195 = vrot.slane %v191, 1
    %v200 = vadd.f32 %v150, %v190
    %v201 = vadd.f32 %v151, %v191
    %v202 = vadd.f32 %v152, %v194
    %v203 = vadd.f32 %v153, %v195
    %s204 = sld [smem:[#allocation2 + $0x2]]
    %v205 = vstv %s204
    %v206 = vmul.f32 %v205, %v75
    %v207 = vmul.f32 %v205, %v76
    %v208 = vmul.f32 %v205, %v77
    %v209 = vmul.f32 %v205, %v78
    %s210 = sld [smem:[#allocation2 + $0x6]]
    %v211 = vstv %s210
    %v212 = vmul.f32 %v211, %v85
    %v213 = vmul.f32 %v211, %v92
    %v214 = vmul.f32 %v211, %v99
    %v215 = vmul.f32 %v211, %v106
    %v216 = vadd.f32 %v206, %v212
    %v217 = vadd.f32 %v207, %v213
    %v218 = vadd.f32 %v208, %v214
    %v219 = vadd.f32 %v209, %v215
    %v224 = vsel %vm174, %v218, %v216
    %v225 = vsel %vm174, %v219, %v217
    %228 = vrot.lane.b32.xlu0 %v224, 112
    %v229 = vpop.permute.xlu0 %228
    %230 = vrot.lane.b32.xlu0 %v225, 112
    %v231 = vpop.permute.xlu0 %230
    %vm232 = vcmp.lt.s32.totalorder %v108, 112
    %v233 = vsel %vm232, %v229, %v231
    %v234 = vsel %vm232, %v231, %v229
    %v235 = vsel %vm136, 1, 0
    %v236 = vsel %vm137, 1, 0
    %vm237 = vcmp.eq.s32.totalorder %v235, 1
    %vm238 = vcmp.eq.s32.totalorder %v236, 1
    %v239 = vsel %vm237, %v233, 0.0
    %v240 = vsel %vm238, %v234, 0.0
    %v243 = vrot.slane %v239, 1
    %v244 = vrot.slane %v240, 1
    %v249 = vadd.f32 %v200, %v239
    %v250 = vadd.f32 %v201, %v240
    %v251 = vadd.f32 %v202, %v243
    %v252 = vadd.f32 %v203, %v244
    %s253 = sld [smem:[#allocation2 + $0x3]]
    %v254 = vstv %s253
    %v255 = vmul.f32 %v254, %v75
    %v256 = vmul.f32 %v254, %v76
    %v257 = vmul.f32 %v254, %v77
    %v258 = vmul.f32 %v254, %v78
    %s259 = sld [smem:[#allocation2 + $0x7]]
    %v260 = vstv %s259
    %v261 = vmul.f32 %v260, %v85
    %v262 = vmul.f32 %v260, %v92
    %v263 = vmul.f32 %v260, %v99
    %v264 = vmul.f32 %v260, %v106
    %v265 = vadd.f32 %v255, %v261
    %v266 = vadd.f32 %v256, %v262
    %v267 = vadd.f32 %v257, %v263
    %v268 = vadd.f32 %v258, %v264
    %vm269 = vmand %vm136, %vm134
    %vm270 = vmand %vm137, %vm135
    %v275 = vsel %vm174, %v267, %v265
    %v276 = vsel %vm174, %v268, %v266
    %279 = vrot.lane.b32.xlu0 %v275, 111
    %v280 = vpop.permute.xlu0 %279
    %281 = vrot.lane.b32.xlu0 %v276, 111
    %v282 = vpop.permute.xlu0 %281
    %vm283 = vcmp.lt.s32.totalorder %v108, 111
    %v284 = vsel %vm283, %v280, %v282
    %v285 = vsel %vm283, %v282, %v280
    %v286 = vsel %vm269, 1, 0
    %v287 = vsel %vm270, 1, 0
    %vm288 = vcmp.eq.s32.totalorder %v286, 1
    %vm289 = vcmp.eq.s32.totalorder %v287, 1
    %v290 = vsel %vm288, %v284, 0.0
    %v291 = vsel %vm289, %v285, 0.0
    %v294 = vrot.slane %v290, 1
    %v295 = vrot.slane %v291, 1
    %v300 = vadd.f32 %v249, %v290
    %v301 = vadd.f32 %v250, %v291
    %v302 = vadd.f32 %v251, %v294
    %v303 = vadd.f32 %v252, %v295
    %v304 = vxor.u32 %v300, 2147483648
    %v305 = vxor.u32 %v301, 2147483648
    %v306 = vxor.u32 %v302, 2147483648
    %v307 = vxor.u32 %v303, 2147483648
    %v308 = vmul.f32 %v304, 1.442695
    %v309 = vpow.pop %v308
    %v310 = vmul.f32 %v305, 1.442695
    %v311 = vpow.pop %v310
    %v312 = vmul.f32 %v306, 1.442695
    %v313 = vpow.pop %v312
    %v314 = vmul.f32 %v307, 1.442695
    %v315 = vpow.pop %v314
    %v316 = vadd.f32 %v309, 1.0
    %v317 = vadd.f32 %v311, 1.0
    %v318 = vadd.f32 %v313, 1.0
    %v319 = vadd.f32 %v315, 1.0
    %v320 = vrcp.pop %v316
    %v321 = vmul.f32 1.0, %v320
    %v322 = vrcp.pop %v317
    %v323 = vmul.f32 1.0, %v322
    %v324 = vrcp.pop %v318
    %v325 = vmul.f32 1.0, %v324
    %v326 = vrcp.pop %v319
    %v327 = vmul.f32 1.0, %v326
    %v328 = vlaneseq
    %v329 = vshrl.u32 %v328, 7
    %v330 = vsub.s32 0, %v329
    %v331 = vrot.slane %v321, %v330
    %v332 = vlaneseq
    %v333 = vshrl.u32 %v332, 7
    %v334 = vsub.s32 0, %v333
    %v335 = vrot.slane %v323, %v334
    %v336 = vlaneseq
    %v337 = vshrl.u32 %v336, 7
    %v338 = vsub.s32 0, %v337
    %v339 = vrot.slane %v325, %v338
    %v340 = vlaneseq
    %v341 = vshrl.u32 %v340, 7
    %v342 = vsub.s32 0, %v341
    %v343 = vrot.slane %v327, %v342
    %v344 = vmul.f32 %v331, %v37
    %v345 = vmul.f32 %v335, %v41
    %v346 = vmul.f32 %v339, %v38
    %v347 = vmul.f32 %v343, %v42
    %v352 = vcombine.low %v344, %v345
    %v353 = vcombine.low %v346, %v347
    %356 = vst [vmem:[#allocation7] sm:$0xff] %v352
    %357 = vst [vmem:[#allocation7 + $0x8] sm:$0xff] %v353
    // Predicated region
    $region18: #{tpu_custom_call.1} parent=1 // pred_check
      _
    $region19: #{tpu_custom_call.1} parent=1 // pred_check_branch
      %359 = sbr.rel (0) target = $region21
    $region20: #{tpu_custom_call.1} parent=1 // pred_region
      %s361 = ssub.s32 256, 256
      %362 = vsyncadd [#allocation4], %s361
      %s363 = sshll.u32 [#allocation7], 4
      %s364 = int_to_ptr.vmem [resolvable:$true] %s363
      %369 = dma.vmem_to_hbm [thread:$0]  %s364, 256, %s2, [#allocation4], 128, 128, 8
    $region21: #{tpu_custom_call.1} parent=1 // pred_fallthru
      _
    // Predicated region
    $region22: #{tpu_custom_call.1} parent=1 // pred_check
      _
    $region23: #{tpu_custom_call.1} parent=1 // pred_check_branch
      %371 = sbr.rel (0) target = $region25
    $region24: #{tpu_custom_call.1} parent=1 // pred_region
      %372 = dma.done [#allocation4], 256
    $region25: #{tpu_custom_call.1} parent=1 // pred_fallthru
      _
    %373 = vsyncpa [#allocation3], 1
    %374 = vsyncpa [#allocation4], 1
    %375 = vsyncpa [#allocation5], 1

</llo_original>
